<compile_context>
chip_gen: v7x
topology: tpu7x:2x2x1
jax: 0.10.0
libtpu: 0.0.40
codegen_flags: <defaults>
</compile_context>

<pallas_src>
import numpy as np
import jax
import jax.numpy as jnp
from jax.experimental import pallas as pl
from jax.experimental.pallas import tpu as pltpu

# ----------------------------- model config ---------------------------------
NUM_INPUTS = 8          # channels of the decoder input
NUM_HIDDENS = 32
NUM_RES_LAYERS = 2
NUM_RES_HIDDENS = 16
BATCH = 2
SPATIAL = 8             # decoder input spatial size (output is 4x -> 32)

H1 = W1 = SPATIAL                 # 8x8 stage (dec_1 / residual stack / dec_2 input)
H3 = W3 = 4 * SPATIAL             # 32x32 stage (dec_3 output)
L1 = BATCH * H1 * W1              # 128 flattened lanes: l = b*64 + y*8 + x
CH2 = NUM_HIDDENS // 2            # 16 channels after dec_2

# MXU operand dtype; accumulation stays f32 via preferred_element_type and all
# VPU elementwise work stays f32 (v5e has no bf16 VALU/EUP).
MXU_DTYPE = jnp.bfloat16

# ConvTranspose2d(k=4, s=2, p=1) tap table:  output row Y = 2*iy + ky - 1, so
# output parity p (Y = 2*m + p) receives two (input offset d, kernel tap k):
TCONV_TAPS = {0: ((-1, 3), (0, 1)), 1: ((0, 2), (1, 0))}
# dec_3 is evaluated on dec_2's phase-decomposed output; phase row-parity p of
# the 16x16 map is only ever read at these 8x8-grid offsets:
D3_SHIFTS = {0: (0, 1), 1: (-1, 0)}

# pltpu.roll assumed to match jnp.roll (out[i] = in[i - shift]); verified by a
# tiny probe kernel in main so the decoder kernel is correct either way.
_ROLL_IS_NUMPY_STYLE = True


def _verify_roll_convention():
    """Probe pltpu.roll's rotate direction once on-device."""
    global _ROLL_IS_NUMPY_STYLE

    def kern(x_ref, o_ref):
        o_ref[...] = pltpu.roll(x_ref[...], 1, axis=1)

    x = jnp.tile(jnp.arange(128, dtype=jnp.float32)[None, :], (8, 1))
    y = pl.pallas_call(
        kern, out_shape=jax.ShapeDtypeStruct((8, 128), jnp.float32))(x)
    first = float(np.asarray(y)[0, 0])
    if first not in (127.0, 1.0):
        raise RuntimeError(f"unexpected pltpu.roll behaviour: out[0,0]={first}")
    # numpy convention: out[:, i] = x[:, i - 1]  =>  out[:, 0] == 127
    _ROLL_IS_NUMPY_STYLE = (first == 127.0)


# ----------------------------- kernel helpers --------------------------------
def _lane_shift(a, d, lanes=L1):
    """out[:, i] = a[:, (i + d) % lanes] for a static int d (one XLU rotate)."""
    d = d % lanes
    if d == 0:
        return a
    shift = (lanes - d) if _ROLL_IS_NUMPY_STYLE else d
    return pltpu.roll(a, shift, axis=1)


# ------------------------------ fused kernel ---------------------------------
def _decoder_kernel(x_ref, masks_ref, w1_ref, b1_ref,
                    rw3_ref, rb3_ref, rw1_ref, rb1_ref,
                    w2_ref, b2_ref, w3_ref, b3_ref, o_ref):
    f32 = jnp.float32

    def tap(a, dy, dx):
        # value of source pixel (y+dy, x+dx) at every lane, 0 outside the image
        s = _lane_shift(a, dy * W1 + dx)
        if dy == 0 and dx == 0:
            return s                                    # centre mask is all-ones
        return s * masks_ref[(dy + 1) * 3 + (dx + 1)]   # (1, L1) broadcast, f32

    def conv3_cols(a):
        # in-register im2col for a 3x3 / pad-1 conv: (C, L1) -> (9*C, L1)
        return jnp.concatenate(
            [tap(a, dy, dx) for dy in (-1, 0, 1) for dx in (-1, 0, 1)], axis=0)

    def mm(w, cols):
        # MXU matmul: bf16 operands, f32 accumulation
        return jnp.dot(w, cols.astype(MXU_DTYPE), preferred_element_type=f32)

    # ---- dec_1: Conv2d(8 -> 32, 3x3, pad 1) --------------------------------
    h = mm(w1_ref[...], conv3_cols(x_ref[...])) + b1_ref[...]           # (32, 128)

    # ---- residual stack: h = relu(h + conv1(relu(conv3(relu(h))))) ---------
    for i in range(NUM_RES_LAYERS):
        rh = jnp.maximum(h, 0.0)
        t = mm(rw3_ref[i], conv3_cols(rh)) + rb3_ref[i]                 # (16, 128)
        u = mm(rw1_ref[i], jnp.maximum(t, 0.0)) + rb1_ref[i]            # (32, 128)
        h = jnp.maximum(h + u, 0.0)

    # ---- dec_2: ConvTranspose2d(32 -> 16, 4, 2, 1) + ReLU ------------------
    # All 4 output phases in ONE GEMM with a zero-padded (64, 288) weight.
    # Row r = (py*2 + px)*16 + co of p is phase (py, px), channel co, on the
    # same 8x8 lane grid as h.
    p = jnp.maximum(mm(w2_ref[...], conv3_cols(h)) + b2_ref[...], 0.0)  # (64, 128)

    # ---- dec_3: ConvTranspose2d(16 -> 3, 4, 2, 1) in phase space -----------
    # The 16x16 intermediate map is never materialised: each dec_3 tap reads a
    # dec_2 phase slab shifted by one of its two relevant 8x8 offsets.
    blocks = []
    for py in range(2):
        for px in range(2):
            base = (py * 2 + px) * CH2
            g_ph = p[base:base + CH2, :]                                # (16, 128)
            for dy in D3_SHIFTS[py]:
                for dx in D3_SHIFTS[px]:
                    blocks.append(tap(g_ph, dy, dx))
    cols3 = jnp.concatenate(blocks, axis=0)                             # (256, 128)
    # Rows of o: r = ((qy*2+qx)*4 + (s*2+t))*3 + co -> output pixel
    # (4a + 2s + qy, 4b + 2t + qx); interleave happens in the XLA wrapper.
    o_ref[...] = mm(w3_ref[...], cols3) + b3_ref[...]                   # (48, 128)


# ------------------------------ forward wrapper ------------------------------
def decoder_forward(kp, x_nchw):
    B = x_nchw.shape[0]
    assert B == BATCH
    # NCHW -> channel-major flattened (Cin, B*H*W)
    x2d = jnp.transpose(x_nchw, (1, 0, 2, 3)).reshape(NUM_INPUTS, B * H1 * W1)

    args = (x2d, kp["masks"], kp["dec1_w"], kp["dec1_b"],
            kp["res_w3"], kp["res_b3"], kp["res_w1"], kp["res_b1"],
            kp["dec2_w"], kp["dec2_b"], kp["dec3_w"], kp["dec3_b"])

    vmem = pl.BlockSpec(memory_space=pltpu.MemorySpace.VMEM)
    out = pl.pallas_call(
        _decoder_kernel,
        out_shape=jax.ShapeDtypeStruct((48, L1), jnp.float32),
        in_specs=[vmem] * len(args),
        out_specs=vmem,
        cost_estimate=pl.CostEstimate(flops=11_100_000, transcendentals=0,
                                      bytes_accessed=120_000),
    )(*args)

    # Interleave the 16 dec_3 phases and go back to NCHW (pure 24 KB permute).
    y = out.reshape(2, 2, 2, 2, 3, B, H1, W1)        # (qy, qx, s, t, co, b, a, n)
    y = jnp.transpose(y, (5, 4, 6, 2, 0, 7, 3, 1))   # (b, co, a, s, qy, n, t, qx)
    return y.reshape(B, 3, H3, W3)


# --------------------------- pure-JAX reference ------------------------------
def _conv2d_ref(x_nhwc, w_oihw, b, pad):
    w = jnp.transpose(w_oihw, (2, 3, 1, 0))          # HWIO
    out = jax.lax.conv_general_dilated(
        x_nhwc, w, (1, 1), [(pad, pad)] * 2,
        dimension_numbers=("NHWC", "HWIO", "NHWC"))
    return out + b


def _convT2d_ref(x_nhwc, w_iohw, b, stride, pad):
    k = w_iohw.shape[2]
    w = jnp.transpose(jnp.flip(w_iohw, (2, 3)), (2, 3, 0, 1))     # HWIO
    out = jax.lax.conv_general_dilated(
        x_nhwc, w, (1, 1), [(k - 1 - pad, k - 1 - pad)] * 2,
        lhs_dilation=(stride, stride),
        dimension_numbers=("NHWC", "HWIO", "NHWC"))
    return out + b


def decoder_ref(params, x_nchw):
    x = jnp.transpose(x_nchw, (0, 2, 3, 1))
    h = _conv2d_ref(x, params["dec1_w"], params["dec1_b"], 1)
    for i in range(NUM_RES_LAYERS):
        c3 = _conv2d_ref(jax.nn.relu(h), params[f"res{i}_w3"], params[f"res{i}_b3"], 1)
        c1 = _conv2d_ref(jax.nn.relu(c3), params[f"res{i}_w1"], params[f"res{i}_b1"], 0)
        h = jax.nn.relu(h + c1)
    h = jax.nn.relu(_convT2d_ref(h, params["dec2_w"], params["dec2_b"], 2, 1))
    out = _convT2d_ref(h, params["dec3_w"], params["dec3_b"], 2, 1)
    return jnp.transpose(out, (0, 3, 1, 2))


# ------------------------------ parameters -----------------------------------
def init_params(key):
    def u(k, shape, fan_in):
        bound = 1.0 / np.sqrt(fan_in)
        return jax.random.uniform(k, shape, jnp.float32, -bound, bound)

    keys = jax.random.split(key, 32)
    ki = iter(keys)
    p = {}
    p["dec1_w"] = u(next(ki), (NUM_HIDDENS, NUM_INPUTS, 3, 3), NUM_INPUTS * 9)
    p["dec1_b"] = u(next(ki), (NUM_HIDDENS,), NUM_INPUTS * 9)
    for i in range(NUM_RES_LAYERS):
        p[f"res{i}_w3"] = u(next(ki), (NUM_RES_HIDDENS, NUM_HIDDENS, 3, 3), NUM_HIDDENS * 9)
        p[f"res{i}_b3"] = u(next(ki), (NUM_RES_HIDDENS,), NUM_HIDDENS * 9)
        p[f"res{i}_w1"] = u(next(ki), (NUM_HIDDENS, NUM_RES_HIDDENS, 1, 1), NUM_RES_HIDDENS)
        p[f"res{i}_b1"] = u(next(ki), (NUM_HIDDENS,), NUM_RES_HIDDENS)
    # ConvTranspose2d weights are (I, O, KH, KW)
    p["dec2_w"] = u(next(ki), (NUM_HIDDENS, CH2, 4, 4), CH2 * 16)
    p["dec2_b"] = u(next(ki), (CH2,), CH2 * 16)
    p["dec3_w"] = u(next(ki), (CH2, 3, 4, 4), 3 * 16)
    p["dec3_b"] = u(next(ki), (3,), 3 * 16)
    return p


def to_kernel_params(p):
    """Rearrange PyTorch-layout weights into the kernel's fused GEMM layouts."""
    bf16 = MXU_DTYPE

    def conv3_w(w):  # (O, I, 3, 3) -> (O, 9*I), tap-major (ky, kx), channels inner
        O, I = w.shape[0], w.shape[1]
        return jnp.transpose(w, (0, 2, 3, 1)).reshape(O, 9 * I).astype(bf16)

    def dec2_w(w):   # (32, 16, 4, 4) -> (64, 288): all 4 phases, zero-padded taps
        w = np.asarray(w, np.float32)
        I, O = w.shape[0], w.shape[1]
        big = np.zeros((4 * O, 9 * I), np.float32)
        for py in range(2):
            for px in range(2):
                for dy, ky in TCONV_TAPS[py]:
                    for dx, kx in TCONV_TAPS[px]:
                        tap_idx = (dy + 1) * 3 + (dx + 1)
                        for co in range(O):
                            r = (py * 2 + px) * O + co
                            big[r, tap_idx * I:(tap_idx + 1) * I] += w[:, co, ky, kx]
        return jnp.asarray(big, bf16)

    def dec3_w(w):   # (16, 3, 4, 4) -> (48, 256): phase-space zero-padded weight
        w = np.asarray(w, np.float32)
        I, O = w.shape[0], w.shape[1]
        big = np.zeros((16 * O, 16 * I), np.float32)
        for qy in range(2):
            for qx in range(2):
                for s in range(2):
                    for t in range(2):
                        for ey, ky in TCONV_TAPS[qy]:
                            pyp = (s + ey) % 2              # dec_2 row-phase read
                            dy = (s + ey - pyp) // 2        # 8x8 row offset
                            iy = D3_SHIFTS[pyp].index(dy)
                            for ex, kx in TCONV_TAPS[qx]:
                                pxp = (t + ex) % 2
                                dx = (t + ex - pxp) // 2
                                ix = D3_SHIFTS[pxp].index(dx)
                                blk = (pyp * 2 + pxp) * 4 + iy * 2 + ix
                                for co in range(O):
                                    r = ((qy * 2 + qx) * 4 + (s * 2 + t)) * O + co
                                    big[r, blk * I:(blk + 1) * I] += w[:, co, ky, kx]
        return jnp.asarray(big, bf16)

    def border_masks():  # (9, 1, L1): tap (dy+1)*3+(dx+1) validity of (y+dy, x+dx)
        lane = np.arange(L1)
        xx = lane % W1
        yy = (lane // W1) % H1
        m = np.zeros((9, 1, L1), np.float32)
        for dy in (-1, 0, 1):
            for dx in (-1, 0, 1):
                ok = ((yy + dy >= 0) & (yy + dy < H1) &
                      (xx + dx >= 0) & (xx + dx < W1))
                m[(dy + 1) * 3 + (dx + 1), 0] = ok.astype(np.float32)
        return jnp.asarray(m)

    kp = {
        "masks": border_masks(),
        "dec1_w": conv3_w(p["dec1_w"]),
        "dec1_b": p["dec1_b"].reshape(-1, 1),
        "res_w3": jnp.stack([conv3_w(p[f"res{i}_w3"]) for i in range(NUM_RES_LAYERS)]),
        "res_b3": jnp.stack([p[f"res{i}_b3"].reshape(-1, 1) for i in range(NUM_RES_LAYERS)]),
        "res_w1": jnp.stack([p[f"res{i}_w1"][:, :, 0, 0].astype(bf16)
                             for i in range(NUM_RES_LAYERS)]),
        "res_b1": jnp.stack([p[f"res{i}_b1"].reshape(-1, 1) for i in range(NUM_RES_LAYERS)]),
        "dec2_w": dec2_w(p["dec2_w"]),
        "dec2_b": jnp.tile(p["dec2_b"], 4).reshape(-1, 1),
        "dec3_w": dec3_w(p["dec3_w"]),
        "dec3_b": jnp.tile(p["dec3_b"], 16).reshape(-1, 1),
    }
    return kp


# --------------------------------- main ---------------------------------------
if __name__ == "__main__":
    _verify_roll_convention()

    key = jax.random.PRNGKey(0)
    kx, kparam = jax.random.split(key)
    x = jax.random.normal(kx, (BATCH, NUM_INPUTS, SPATIAL, SPATIAL), jnp.float32)  # NCHW

    params = init_params(kparam)
    kparams = to_kernel_params(params)

    fwd = jax.jit(decoder_forward)
    out = jax.block_until_ready(fwd(kparams, x))
    assert out.shape == (BATCH, 3, H3, W3), out.shape

    ref = jax.block_until_ready(decoder_ref(params, x))
    np.testing.assert_allclose(np.asarray(out), np.asarray(ref), rtol=2e-2, atol=2e-2)

    print("KERNEL_OK")
</pallas_src>

<mosaic_0001>
module attributes {stable_mosaic.version = 11 : i64} {
  func.func @kern(%arg0: memref<8x128xf32, #tpu.memory_space<vmem>>, %arg1: memref<8x128xf32, #tpu.memory_space<vmem>>) attributes {dimension_semantics = [], scalar_prefetch = 0 : i64, scratch_operands = 0 : i64, tpu.core_type = #tpu.core_type<tc>} {
    %c0 = arith.constant 0 : index
    %c0_0 = arith.constant 0 : index
    %0 = vector.load %arg0[%c0, %c0_0] : memref<8x128xf32, #tpu.memory_space<vmem>>, vector<8x128xf32>
    %c1_i32 = arith.constant 1 : i32
    %1 = tpu.dynamic_rotate %0 by %c1_i32 dim 1 : vector<8x128xf32>, i32 -> vector<8x128xf32>
    %c0_1 = arith.constant 0 : index
    %c0_2 = arith.constant 0 : index
    %2 = vector.load %arg1[%c0_1, %c0_2] : memref<8x128xf32, #tpu.memory_space<vmem>>, vector<8x128xf32>
    tpu.vector_store %arg1[%c0_1, %c0_2], %1 {strides = array<i32>} : memref<8x128xf32, #tpu.memory_space<vmem>>, vector<8x128xf32>,
    return
  }
}

</mosaic_0001>

<llo_original>
// kernel: tpu_custom_call.1
$region0: #{tpu_custom_call.1}
  #allocation0 [shape = 'u32[]', space=smem, size = 0x4, offset = 0x4, fixed_abs, tag = 'smem constant byte address 0x4 - core index']
  #allocation1 [shape = 'u32[144,128]{1,0:T(1,128)}', space=vmem, size = 0x12000, scoped, tag = 'internal scratch']
  %s0 = inlined_call_operand.hbm [shape: f32[8,128], index: 0, kind: input, shape index: {}]
  %s1 = inlined_call_operand.hbm [shape: f32[8,128], index: 1, kind: output, shape index: {}]
  %s2 = sld [smem:[#allocation0]]
  $region18: #{tpu_custom_call.1} parent=0
    _
  %s4 = ssub.s32 1, %s2
  %s5 = scalar_select 0, %s4, %s2
  $region1: #{tpu_custom_call.1} parent=0
    #allocation2 [shape = 'u8[4096]{0}', space=vmem, size = 0x1000, scoped, tag = 'input window, operand 0, single buffered']
    #allocation3 [shape = 's32[1]{0}', space=sflag, size = 0x4, scoped, tag = 'scoped memory for tpu_custom_call.1']
    #allocation4 [shape = 's32[1]{0}', space=sflag, size = 0x4, scoped, tag = 'scoped memory for tpu_custom_call.1']
    #allocation5 [shape = 'u8[4096]{0}', space=vmem, size = 0x1000, scoped, tag = 'output window, operand 0, single buffered']
    %6 = vsyncpa [#allocation3], 0
    %7 = vsyncpa [#allocation4], 0
    // Predicated region
    $region2: #{tpu_custom_call.1} parent=1 // pred_check
      _
    $region3: #{tpu_custom_call.1} parent=1 // pred_check_branch
      %9 = sbr.rel (0) target = $region5
    $region4: #{tpu_custom_call.1} parent=1 // pred_region
      %s11 = ssub.s32 128, 128
      %12 = vsyncadd [#allocation3], %s11
      %s14 = sshll.u32 [#allocation2], 4
      %s15 = int_to_ptr.vmem [resolvable:$true] %s14
      %17 = dma.hbm_to_vmem [thread:$0]  %s0, 128, %s15, [#allocation3]
    $region5: #{tpu_custom_call.1} parent=1 // pred_fallthru
      _
    // Predicated region
    $region6: #{tpu_custom_call.1} parent=1 // pred_check
      _
    $region7: #{tpu_custom_call.1} parent=1 // pred_check_branch
      %19 = sbr.rel (0) target = $region9
    $region8: #{tpu_custom_call.1} parent=1 // pred_region
      %20 = dma.done [#allocation3], 128
    $region9: #{tpu_custom_call.1} parent=1 // pred_fallthru
      _
    %v21 = vld [vmem:[#allocation2] sm:$0xff]
    %22 = vrot.lane.b32.xlu0 %v21, 1
    %v23 = vpop.permute.xlu0 %22
    %24 = vst [vmem:[#allocation5] sm:$0xff] %v23
    // Predicated region
    $region10: #{tpu_custom_call.1} parent=1 // pred_check
      _
    $region11: #{tpu_custom_call.1} parent=1 // pred_check_branch
      %26 = sbr.rel (0) target = $region13
    $region12: #{tpu_custom_call.1} parent=1 // pred_region
      %s28 = ssub.s32 128, 128
      %29 = vsyncadd [#allocation4], %s28
      %s31 = sshll.u32 [#allocation5], 4
      %s32 = int_to_ptr.vmem [resolvable:$true] %s31
      %34 = dma.vmem_to_hbm [thread:$0]  %s32, 128, %s1, [#allocation4]
    $region13: #{tpu_custom_call.1} parent=1 // pred_fallthru
      _
    // Predicated region
    $region14: #{tpu_custom_call.1} parent=1 // pred_check
      _
    $region15: #{tpu_custom_call.1} parent=1 // pred_check_branch
      %36 = sbr.rel (0) target = $region17
    $region16: #{tpu_custom_call.1} parent=1 // pred_region
      %37 = dma.done [#allocation4], 128
    $region17: #{tpu_custom_call.1} parent=1 // pred_fallthru
      _
    %38 = vsyncpa [#allocation3], 1
    %39 = vsyncpa [#allocation4], 1

</llo_original>
